<compile_context>
chip_gen: v7x
topology: tpu7x:2x2x1
jax: 0.10.0
libtpu: 0.0.40
codegen_flags: <defaults>
</compile_context>

<pallas_src>
import jax
import jax.numpy as jnp
from jax.experimental import pallas as pl
from jax.experimental.pallas import tpu as pltpu


def _round_up(x, m):
    return ((x + m - 1) // m) * m


def _vmem_capacity_bytes():
    """Physical per-core VMEM; conservative 64 MiB (v7x) fallback."""
    try:
        cap = int(pltpu.get_tpu_info().vmem_capacity_bytes)
        if cap > 0:
            return cap
    except Exception:
        pass
    return 64 << 20


def bc_policy_kernel(x_ref, w1_ref, b1_ref, w2_ref, b2_ref, w3_ref, b3_ref, out_ref):
    """Fused encoder + policy-head MLP for one row tile.

    x:  (TILE_N, obs_dim) float32  (cast in-kernel to the weight dtype)
    w1: (obs_dim,  hidden_p)  b1: (1, hidden_p)   -> ReLU   (obs_encoder)
    w2: (hidden_p, hidden_p)  b2: (1, hidden_p)   -> ReLU   (model layer 1)
    w3: (hidden_p, act_dim)   b3: (1, act_dim)              (model layer 2)
    out: (TILE_N, act_dim) float32
    All MXU passes accumulate in f32; biases are f32 and added to the f32
    accumulators; activations are cast back to the weight dtype only to feed
    the next MXU pass.
    """
    x = x_ref[...].astype(w1_ref.dtype)
    h1 = jnp.dot(x, w1_ref[...], preferred_element_type=jnp.float32) + b1_ref[...]
    h1 = jnp.maximum(h1, 0.0)
    h2 = jnp.dot(h1.astype(w2_ref.dtype), w2_ref[...],
                 preferred_element_type=jnp.float32) + b2_ref[...]
    h2 = jnp.maximum(h2, 0.0)
    out = jnp.dot(h2.astype(w3_ref.dtype), w3_ref[...],
                  preferred_element_type=jnp.float32) + b3_ref[...]
    out_ref[...] = out.astype(out_ref.dtype)


def prepare_params(params, *, compute_dtype=jnp.float32):
    """Pad hidden dim to 128 lanes + cast weights ONCE (hoisted out of forward).

    Zero padding keeps padded hidden lanes exactly zero through bias+ReLU, so
    they never perturb the real output columns. The act dim is NOT padded: the
    output stream stays narrow (masked store, 16x less HBM write traffic).
    """
    w1, b1, w2, b2, w3, b3 = params
    hidden = w1.shape[1]
    hidden_p = _round_up(hidden, 128)
    dh = hidden_p - hidden
    w1p = jnp.pad(w1, ((0, 0), (0, dh))).astype(compute_dtype)
    b1p = jnp.pad(b1, ((0, 0), (0, dh))).astype(jnp.float32)
    w2p = jnp.pad(w2, ((0, dh), (0, dh))).astype(compute_dtype)
    b2p = jnp.pad(b2, ((0, 0), (0, dh))).astype(jnp.float32)
    w3p = jnp.pad(w3, ((0, dh), (0, 0))).astype(compute_dtype)
    b3p = b3.astype(jnp.float32)
    return (w1p, b1p, w2p, b2p, w3p, b3p)


def _make_spec(shape, index_map, bufs, use_pipeline_mode):
    if use_pipeline_mode and bufs is not None:
        try:
            return pl.BlockSpec(shape, index_map, pipeline_mode=pl.Buffered(bufs))
        except Exception:
            pass
    return pl.BlockSpec(shape, index_map)


def _run_pallas(xp, prepared, *, tile_n, n_pad, grid, obs_dim, hidden_p, act_dim,
                vmem_limit, use_pipeline_mode):
    in_specs = [
        # x: row-tiled, triple-buffered so the three short matmuls can hide DMA
        _make_spec((tile_n, obs_dim), lambda i: (i, 0), 3, use_pipeline_mode),
        # parameters: constant index_map -> VMEM-resident; single buffer each
        _make_spec((obs_dim, hidden_p), lambda i: (0, 0), 1, use_pipeline_mode),
        _make_spec((1, hidden_p), lambda i: (0, 0), 1, use_pipeline_mode),
        _make_spec((hidden_p, hidden_p), lambda i: (0, 0), 1, use_pipeline_mode),
        _make_spec((1, hidden_p), lambda i: (0, 0), 1, use_pipeline_mode),
        _make_spec((hidden_p, act_dim), lambda i: (0, 0), 1, use_pipeline_mode),
        _make_spec((1, act_dim), lambda i: (0, 0), 1, use_pipeline_mode),
    ]
    out = pl.pallas_call(
        bc_policy_kernel,
        out_shape=jax.ShapeDtypeStruct((n_pad, act_dim), jnp.float32),
        grid=grid,
        in_specs=in_specs,
        # Narrow output block: last dim equals the full array dim -> legal;
        # avoids the 128-lane padded write stream and the post-kernel slice.
        out_specs=pl.BlockSpec((tile_n, act_dim), lambda i: (i, 0)),
        compiler_params=pltpu.CompilerParams(
            dimension_semantics=("parallel",),
            vmem_limit_bytes=int(vmem_limit),
        ),
    )(xp, *prepared)
    return out


def bc_policy_forward(inputs, prepared_params, *, max_tile_rows=4096):
    """inputs: (B, T, obs_dim) float32 -> pred: (B, T, act_dim) float32.

    `prepared_params` must come from prepare_params() (padded + cast once).
    """
    w1p, b1p, w2p, b2p, w3p, b3p = prepared_params
    B, T, obs_dim = inputs.shape
    assert w1p.shape[0] == obs_dim
    hidden_p = w1p.shape[1]
    act_dim = w3p.shape[1]
    N = B * T

    cdt = w1p.dtype
    bpe = jnp.dtype(cdt).itemsize

    # --- generation-aware VMEM budget (leave ~1/8 physical as headroom) -------
    vmem_cap = _vmem_capacity_bytes()
    budget = vmem_cap - max(vmem_cap // 8, 8 << 20)      # ~56 MiB v7x, ~112 MiB v5e/v6e

    # --- derive tile_n from the budget -----------------------------------------
    fixed = ((obs_dim * hidden_p + hidden_p * hidden_p + hidden_p * act_dim) * bpe
             + (2 * hidden_p + act_dim) * 4)             # single-buffered params
    per_row = (3 * obs_dim * 4                            # x tile (3 buffers, f32)
               + 2 * act_dim * 4                          # out tile (2 buffers, f32)
               + 2 * hidden_p * 4                         # h1/h2 f32 accumulators
               + 2 * hidden_p * bpe)                      # casted copies for MXU
    avail = max(budget - fixed - (4 << 20), per_row * 16)
    tile_budget = max(16, (avail // per_row) // 16 * 16)

    # >=2 grid steps so the parallel row axis spans both TCs on v7x (free on 1-TC chips)
    tile_steps = _round_up(pl.cdiv(N, 2), 8)
    tile_n = max(8, min(tile_budget, tile_steps, max_tile_rows))

    n_pad = _round_up(N, tile_n)
    grid = (n_pad // tile_n,)

    # --- x stays f32 in HBM (cast happens in-kernel) ---------------------------
    x = inputs.reshape(N, obs_dim)
    if n_pad != N:
        x = jnp.pad(x, ((0, n_pad - N), (0, 0)))

    kwargs = dict(tile_n=tile_n, n_pad=n_pad, grid=grid, obs_dim=obs_dim,
                  hidden_p=hidden_p, act_dim=act_dim, vmem_limit=budget)
    try:
        out = _run_pallas(x, prepared_params, use_pipeline_mode=True, **kwargs)
        jax.block_until_ready(out)
    except Exception:
        # Fallback: default double-buffered pipeline (older Pallas without Buffered()).
        out = _run_pallas(x, prepared_params, use_pipeline_mode=False, **kwargs)
        jax.block_until_ready(out)

    return out[:N].reshape(B, T, act_dim)


def init_params(key, obs_dim, hidden, act_dim):
    k1, k2, k3 = jax.random.split(key, 3)
    w1 = jax.random.normal(k1, (obs_dim, hidden), jnp.float32) * 0.1
    b1 = jnp.zeros((1, hidden), jnp.float32)
    w2 = jax.random.normal(k2, (hidden, hidden), jnp.float32) * 0.1
    b2 = jnp.zeros((1, hidden), jnp.float32)
    w3 = jax.random.normal(k3, (hidden, act_dim), jnp.float32) * 0.1
    b3 = jnp.zeros((1, act_dim), jnp.float32)
    return (w1, b1, w2, b2, w3, b3)


def reference_forward(inputs, params):
    """Plain-JAX reference mirroring the PyTorch forward (non-visual path)."""
    w1, b1, w2, b2, w3, b3 = params
    obs = jnp.maximum(inputs @ w1 + b1, 0.0)          # obs_encoder
    h = jnp.maximum(obs @ w2 + b2, 0.0)               # model layer 1
    return h @ w3 + b3                                 # model layer 2


if __name__ == "__main__":
    B, T, obs_dim, hidden, act_dim = 2, 8, 16, 32, 8

    key = jax.random.PRNGKey(0)
    k_in, k_p = jax.random.split(key)
    inputs = jax.random.normal(k_in, (B, T, obs_dim), jnp.float32)
    params = init_params(k_p, obs_dim, hidden, act_dim)

    ref = reference_forward(inputs, params)

    # f32 path: matches the reference tightly.
    params_f32 = prepare_params(params, compute_dtype=jnp.float32)
    pred_f32 = bc_policy_forward(inputs, params_f32)
    jax.block_until_ready(pred_f32)
    assert pred_f32.shape == (B, T, act_dim)
    assert jnp.allclose(pred_f32, ref, atol=1e-5, rtol=1e-5), "f32 mismatch vs reference"

    # bf16-operand path (f32 accumulation): the v6e/v7x MXU-peak configuration.
    params_bf16 = prepare_params(params, compute_dtype=jnp.bfloat16)
    pred_bf16 = bc_policy_forward(inputs, params_bf16)
    jax.block_until_ready(pred_bf16)
    assert pred_bf16.shape == (B, T, act_dim)
    assert jnp.allclose(pred_bf16, ref, atol=3e-2, rtol=3e-2), "bf16 mismatch vs reference"

    print("KERNEL_OK")
</pallas_src>

<mosaic_0001>
module attributes {stable_mosaic.version = 11 : i64} {
  func.func @bc_policy_kernel(%arg0: i32, %arg1: memref<8x16xf32, #tpu.memory_space<vmem>>, %arg2: memref<16x128xf32, #tpu.memory_space<vmem>>, %arg3: memref<1x128xf32, #tpu.memory_space<vmem>>, %arg4: memref<128x128xf32, #tpu.memory_space<vmem>>, %arg5: memref<1x128xf32, #tpu.memory_space<vmem>>, %arg6: memref<128x8xf32, #tpu.memory_space<vmem>>, %arg7: memref<1x8xf32, #tpu.memory_space<vmem>>, %arg8: memref<8x8xf32, #tpu.memory_space<vmem>>) attributes {dimension_semantics = [#tpu.dimension_semantics<parallel>], iteration_bounds = array<i64: 2>, scalar_prefetch = 0 : i64, scratch_operands = 0 : i64, tpu.core_type = #tpu.core_type<tc>, window_params = [{transform_indices = @transform_0, window_bounds = array<i64: 8, 16>}, {pipeline_mode = #tpu.pipeline_mode<synchronous>, transform_indices = @transform_1, window_bounds = array<i64: 16, 128>}, {pipeline_mode = #tpu.pipeline_mode<synchronous>, transform_indices = @transform_2, window_bounds = array<i64: 1, 128>}, {pipeline_mode = #tpu.pipeline_mode<synchronous>, transform_indices = @transform_3, window_bounds = array<i64: 128, 128>}, {pipeline_mode = #tpu.pipeline_mode<synchronous>, transform_indices = @transform_4, window_bounds = array<i64: 1, 128>}, {pipeline_mode = #tpu.pipeline_mode<synchronous>, transform_indices = @transform_5, window_bounds = array<i64: 128, 8>}, {pipeline_mode = #tpu.pipeline_mode<synchronous>, transform_indices = @transform_6, window_bounds = array<i64: 1, 8>}, {transform_indices = @transform_7, window_bounds = array<i64: 8, 8>}]} {
    %c0 = arith.constant 0 : index
    %c0_0 = arith.constant 0 : index
    %0 = vector.load %arg1[%c0, %c0_0] : memref<8x16xf32, #tpu.memory_space<vmem>>, vector<8x16xf32>
    %c0_1 = arith.constant 0 : index
    %c0_2 = arith.constant 0 : index
    %1 = vector.load %arg2[%c0_1, %c0_2] : memref<16x128xf32, #tpu.memory_space<vmem>>, vector<16x128xf32>
    %cst = arith.constant dense<0.000000e+00> : vector<8x128xf32>
    %2 = tpu.matmul %0, %1, %cst {dimension_numbers = #tpu.dot_dimension_numbers<[1], [0], [0], [1], [0, 0, 1, 1], [], []>} : vector<8x16xf32>, vector<16x128xf32>, vector<8x128xf32> -> vector<8x128xf32>
    %c0_3 = arith.constant 0 : index
    %c0_4 = arith.constant 0 : index
    %3 = vector.load %arg3[%c0_3, %c0_4] : memref<1x128xf32, #tpu.memory_space<vmem>>, vector<1x128xf32>
    %4 = vector.broadcast %3 : vector<1x128xf32> to vector<8x128xf32>
    %5 = arith.addf %2, %4 : vector<8x128xf32>
    %cst_5 = arith.constant 0.000000e+00 : f32
    %6 = vector.broadcast %cst_5 : f32 to vector<8x128xf32>
    %7 = arith.maximumf %5, %6 : vector<8x128xf32>
    %c0_6 = arith.constant 0 : index
    %c0_7 = arith.constant 0 : index
    %8 = vector.load %arg4[%c0_6, %c0_7] : memref<128x128xf32, #tpu.memory_space<vmem>>, vector<128x128xf32>
    %cst_8 = arith.constant dense<0.000000e+00> : vector<8x128xf32>
    %9 = tpu.matmul %7, %8, %cst_8 {dimension_numbers = #tpu.dot_dimension_numbers<[1], [0], [0], [1], [0, 0, 1, 1], [], []>} : vector<8x128xf32>, vector<128x128xf32>, vector<8x128xf32> -> vector<8x128xf32>
    %c0_9 = arith.constant 0 : index
    %c0_10 = arith.constant 0 : index
    %10 = vector.load %arg5[%c0_9, %c0_10] : memref<1x128xf32, #tpu.memory_space<vmem>>, vector<1x128xf32>
    %11 = vector.broadcast %10 : vector<1x128xf32> to vector<8x128xf32>
    %12 = arith.addf %9, %11 : vector<8x128xf32>
    %cst_11 = arith.constant 0.000000e+00 : f32
    %13 = vector.broadcast %cst_11 : f32 to vector<8x128xf32>
    %14 = arith.maximumf %12, %13 : vector<8x128xf32>
    %c0_12 = arith.constant 0 : index
    %c0_13 = arith.constant 0 : index
    %15 = vector.load %arg6[%c0_12, %c0_13] : memref<128x8xf32, #tpu.memory_space<vmem>>, vector<128x8xf32>
    %cst_14 = arith.constant dense<0.000000e+00> : vector<8x8xf32>
    %16 = tpu.matmul %14, %15, %cst_14 {dimension_numbers = #tpu.dot_dimension_numbers<[1], [0], [0], [1], [0, 0, 1, 1], [], []>} : vector<8x128xf32>, vector<128x8xf32>, vector<8x8xf32> -> vector<8x8xf32>
    %c0_15 = arith.constant 0 : index
    %c0_16 = arith.constant 0 : index
    %17 = vector.load %arg7[%c0_15, %c0_16] : memref<1x8xf32, #tpu.memory_space<vmem>>, vector<1x8xf32>
    %18 = vector.broadcast %17 : vector<1x8xf32> to vector<8x8xf32>
    %19 = arith.addf %16, %18 : vector<8x8xf32>
    %c0_17 = arith.constant 0 : index
    %c0_18 = arith.constant 0 : index
    %20 = vector.load %arg8[%c0_17, %c0_18] : memref<8x8xf32, #tpu.memory_space<vmem>>, vector<8x8xf32>
    tpu.vector_store %arg8[%c0_17, %c0_18], %19 {strides = array<i32>} : memref<8x8xf32, #tpu.memory_space<vmem>>, vector<8x8xf32>,
    return
  }
  func.func @transform_0(%arg0: i32) -> (i32, i32) {
    %c0_i32 = arith.constant 0 : i32
    %c0_i32_0 = arith.constant 0 : i32
    return %arg0, %c0_i32 : i32, i32
  }
  func.func @transform_1(%arg0: i32) -> (i32, i32) {
    %c0_i32 = arith.constant 0 : i32
    %c0_i32_0 = arith.constant 0 : i32
    %c0_i32_1 = arith.constant 0 : i32
    return %c0_i32, %c0_i32_0 : i32, i32
  }
  func.func @transform_2(%arg0: i32) -> (i32, i32) {
    %c0_i32 = arith.constant 0 : i32
    %c0_i32_0 = arith.constant 0 : i32
    %c0_i32_1 = arith.constant 0 : i32
    return %c0_i32, %c0_i32_0 : i32, i32
  }
  func.func @transform_3(%arg0: i32) -> (i32, i32) {
    %c0_i32 = arith.constant 0 : i32
    %c0_i32_0 = arith.constant 0 : i32
    %c0_i32_1 = arith.constant 0 : i32
    return %c0_i32, %c0_i32_0 : i32, i32
  }
  func.func @transform_4(%arg0: i32) -> (i32, i32) {
    %c0_i32 = arith.constant 0 : i32
    %c0_i32_0 = arith.constant 0 : i32
    %c0_i32_1 = arith.constant 0 : i32
    return %c0_i32, %c0_i32_0 : i32, i32
  }
  func.func @transform_5(%arg0: i32) -> (i32, i32) {
    %c0_i32 = arith.constant 0 : i32
    %c0_i32_0 = arith.constant 0 : i32
    %c0_i32_1 = arith.constant 0 : i32
    return %c0_i32, %c0_i32_0 : i32, i32
  }
  func.func @transform_6(%arg0: i32) -> (i32, i32) {
    %c0_i32 = arith.constant 0 : i32
    %c0_i32_0 = arith.constant 0 : i32
    %c0_i32_1 = arith.constant 0 : i32
    return %c0_i32, %c0_i32_0 : i32, i32
  }
  func.func @transform_7(%arg0: i32) -> (i32, i32) {
    %c0_i32 = arith.constant 0 : i32
    %c0_i32_0 = arith.constant 0 : i32
    return %arg0, %c0_i32 : i32, i32
  }
}

</mosaic_0001>

<llo_original>
// kernel: tpu_custom_call.1
$region0: #{tpu_custom_call.1}
  #allocation0 [shape = 'u32[]', space=smem, size = 0x4, offset = 0x4, fixed_abs, tag = 'smem constant byte address 0x4 - core index']
  #allocation1 [shape = 'u32[144,128]{1,0:T(1,128)}', space=vmem, size = 0x12000, scoped, tag = 'internal scratch']
  %s0 = inlined_call_operand.vmem [shape: f32[16,16], index: 0, kind: input, shape index: {}]
  %s1 = inlined_call_operand.hbm [shape: f32[16,128], index: 1, kind: input, shape index: {}]
  %s2 = inlined_call_operand.vmem [shape: f32[1,128], index: 2, kind: input, shape index: {}]
  %s3 = inlined_call_operand.vmem [shape: f32[128,128], index: 3, kind: input, shape index: {}]
  %s4 = inlined_call_operand.vmem [shape: f32[1,128], index: 4, kind: input, shape index: {}]
  %s5 = inlined_call_operand.vmem [shape: f32[128,8], index: 5, kind: input, shape index: {}]
  %s6 = inlined_call_operand.vmem [shape: f32[1,8], index: 6, kind: input, shape index: {}]
  %s7 = inlined_call_operand.vmem [shape: f32[16,8], index: 7, kind: output, shape index: {}]
  %s8 = sld [smem:[#allocation0]]
  $region65: #{tpu_custom_call.1} parent=0
    _
  %s10 = ssub.s32 1, %s8
  %s11 = scalar_select 0, %s10, %s8
  $region1: #{tpu_custom_call.1} parent=0
    #allocation2 [shape = 'u8[8192]{0}', space=vmem, size = 0x2000, scoped, tag = 'input window, operand 1, single buffered']
    #allocation3 [shape = 's32[2]{0}', space=sflag, size = 0x8, scoped, tag = 'scoped memory for tpu_custom_call.1']
    %12 = vsyncpa [#allocation3], 0
    loop: start=0, step=1, limit=4
    $region2: #{tpu_custom_call.1} parent=1 // loop_pre_header
      _
    $region3: #{tpu_custom_call.1} parent=1 // loop_header
      %s14 = sphi 0, %s18
      %p15 = scmp.ge.s32.totalorder %s14, 4
      %s24 = sphi 0, %s26
      %s27 = sphi 0, %s24
      %s28 = sphi 0, %s27
      %s44 = sphi 0, %s28
      %s48 = sphi 0, %s48
      %s50 = sphi 0, %s48
      %s51 = sphi 0, %s50
      %s65 = sphi 0, %s51
      %s69 = sphi 0, %s69
      %s71 = sphi 0, %s69
      %s72 = sphi 0, %s71
      %s86 = sphi 0, %s72
      %s90 = sphi 0, %s90
      %s92 = sphi 0, %s90
      %s93 = sphi 0, %s92
      %s107 = sphi 0, %s93
      %s111 = sphi 0, %s111
      %s113 = sphi 0, %s111
      %s114 = sphi 0, %s113
      %s128 = sphi 0, %s114
      %s132 = sphi 0, %s132
      %s134 = sphi 0, %s132
      %s135 = sphi 0, %s134
      %s149 = sphi 0, %s135
      %s153 = sphi 0, %s153
      %s155 = sphi 0, %s153
      %s156 = sphi 0, %s155
      %s170 = sphi 0, %s156
      %s176 = sphi 0, %s178
      %s179 = sphi 0, %s176
      %s180 = sphi 0, %s179
      %s196 = sphi 0, %s180
    $region4: #{tpu_custom_call.1} parent=1 // loop_header_branch
      %17 = sbr.rel (%p15) target = $region8
    $region5: #{tpu_custom_call.1} parent=1 // loop_body
      %s19 = ssub.s32 %s14, 1
      %s20 = ssub.s32 %s14, 2
      %s21 = sadd.s32 %s14, 1
      %s22 = ssub.s32 %s14, %s21
      %p23 = scmp.eq.s32.totalorder %s22, 0
      %s25 = sadd.s32 %s24, 1
      %s26 = scalar_select %p23, %s24, %s25
      %p29 = pneg %p23
      %p30 = scmp.eq.s32.totalorder %s14, 1
      %p31 = por %p29, %p30
      %p32 = scmp.ne.s32.totalorder %s24, %s27
      %p33 = scmp.eq.s32.totalorder %s14, 0
      %p34 = por %p32, %p33
      %p35 = scmp.ne.s32.totalorder %s24, %s27
      %p36 = scmp.eq.s32.totalorder %s19, 1
      %p37 = por %p35, %p36
      %p38 = scmp.ne.s32.totalorder %s27, %s28
      %p39 = scmp.eq.s32.totalorder %s19, 0
      %p40 = por %p38, %p39
      %p41 = scmp.ne.s32.totalorder %s27, %s28
      %p42 = scmp.eq.s32.totalorder %s20, 1
      %p43 = por %p41, %p42
      %p45 = scmp.ne.s32.totalorder %s28, %s44
      %p46 = scmp.eq.s32.totalorder %s20, 0
      %p47 = por %p45, %p46
      %s49 = sadd.s32 %s48, 1
      %p52 = scmp.eq.s32.totalorder %s14, 1
      %p53 = scmp.ne.s32.totalorder %s48, %s50
      %p54 = scmp.eq.s32.totalorder %s14, 0
      %p55 = por %p53, %p54
      %p56 = scmp.ne.s32.totalorder %s48, %s50
      %p57 = scmp.eq.s32.totalorder %s19, 1
      %p58 = por %p56, %p57
      %p59 = scmp.ne.s32.totalorder %s50, %s51
      %p60 = scmp.eq.s32.totalorder %s19, 0
      %p61 = por %p59, %p60
      %p62 = scmp.ne.s32.totalorder %s50, %s51
      %p63 = scmp.eq.s32.totalorder %s20, 1
      %p64 = por %p62, %p63
      %p66 = scmp.ne.s32.totalorder %s51, %s65
      %p67 = scmp.eq.s32.totalorder %s20, 0
      %p68 = por %p66, %p67
      %s70 = sadd.s32 %s69, 1
      %p73 = scmp.eq.s32.totalorder %s14, 1
      %p74 = scmp.ne.s32.totalorder %s69, %s71
      %p75 = scmp.eq.s32.totalorder %s14, 0
      %p76 = por %p74, %p75
      %p77 = scmp.ne.s32.totalorder %s69, %s71
      %p78 = scmp.eq.s32.totalorder %s19, 1
      %p79 = por %p77, %p78
      %p80 = scmp.ne.s32.totalorder %s71, %s72
      %p81 = scmp.eq.s32.totalorder %s19, 0
      %p82 = por %p80, %p81
      %p83 = scmp.ne.s32.totalorder %s71, %s72
      %p84 = scmp.eq.s32.totalorder %s20, 1
      %p85 = por %p83, %p84
      %p87 = scmp.ne.s32.totalorder %s72, %s86
      %p88 = scmp.eq.s32.totalorder %s20, 0
      %p89 = por %p87, %p88
      %s91 = sadd.s32 %s90, 1
      %p94 = scmp.eq.s32.totalorder %s14, 1
      %p95 = scmp.ne.s32.totalorder %s90, %s92
      %p96 = scmp.eq.s32.totalorder %s14, 0
      %p97 = por %p95, %p96
      %p98 = scmp.ne.s32.totalorder %s90, %s92
      %p99 = scmp.eq.s32.totalorder %s19, 1
      %p100 = por %p98, %p99
      %p101 = scmp.ne.s32.totalorder %s92, %s93
      %p102 = scmp.eq.s32.totalorder %s19, 0
      %p103 = por %p101, %p102
      %p104 = scmp.ne.s32.totalorder %s92, %s93
      %p105 = scmp.eq.s32.totalorder %s20, 1
      %p106 = por %p104, %p105
      %p108 = scmp.ne.s32.totalorder %s93, %s107
      %p109 = scmp.eq.s32.totalorder %s20, 0
      %p110 = por %p108, %p109
      %s112 = sadd.s32 %s111, 1
      %p115 = scmp.eq.s32.totalorder %s14, 1
      %p116 = scmp.ne.s32.totalorder %s111, %s113
      %p117 = scmp.eq.s32.totalorder %s14, 0
      %p118 = por %p116, %p117
      %p119 = scmp.ne.s32.totalorder %s111, %s113
      %p120 = scmp.eq.s32.totalorder %s19, 1
      %p121 = por %p119, %p120
      %p122 = scmp.ne.s32.totalorder %s113, %s114
      %p123 = scmp.eq.s32.totalorder %s19, 0
      %p124 = por %p122, %p123
      %p125 = scmp.ne.s32.totalorder %s113, %s114
      %p126 = scmp.eq.s32.totalorder %s20, 1
      %p127 = por %p125, %p126
      %p129 = scmp.ne.s32.totalorder %s114, %s128
      %p130 = scmp.eq.s32.totalorder %s20, 0
      %p131 = por %p129, %p130
      %s133 = sadd.s32 %s132, 1
      %p136 = scmp.eq.s32.totalorder %s14, 1
      %p137 = scmp.ne.s32.totalorder %s132, %s134
      %p138 = scmp.eq.s32.totalorder %s14, 0
      %p139 = por %p137, %p138
      %p140 = scmp.ne.s32.totalorder %s132, %s134
      %p141 = scmp.eq.s32.totalorder %s19, 1
      %p142 = por %p140, %p141
      %p143 = scmp.ne.s32.totalorder %s134, %s135
      %p144 = scmp.eq.s32.totalorder %s19, 0
      %p145 = por %p143, %p144
      %p146 = scmp.ne.s32.totalorder %s134, %s135
      %p147 = scmp.eq.s32.totalorder %s20, 1
      %p148 = por %p146, %p147
      %p150 = scmp.ne.s32.totalorder %s135, %s149
      %p151 = scmp.eq.s32.totalorder %s20, 0
      %p152 = por %p150, %p151
      %s154 = sadd.s32 %s153, 1
      %p157 = scmp.eq.s32.totalorder %s14, 1
      %p158 = scmp.ne.s32.totalorder %s153, %s155
      %p159 = scmp.eq.s32.totalorder %s14, 0
      %p160 = por %p158, %p159
      %p161 = scmp.ne.s32.totalorder %s153, %s155
      %p162 = scmp.eq.s32.totalorder %s19, 1
      %p163 = por %p161, %p162
      %p164 = scmp.ne.s32.totalorder %s155, %s156
      %p165 = scmp.eq.s32.totalorder %s19, 0
      %p166 = por %p164, %p165
      %p167 = scmp.ne.s32.totalorder %s155, %s156
      %p168 = scmp.eq.s32.totalorder %s20, 1
      %p169 = por %p167, %p168
      %p171 = scmp.ne.s32.totalorder %s156, %s170
      %p172 = scmp.eq.s32.totalorder %s20, 0
      %p173 = por %p171, %p172
      %s174 = ssub.s32 %s14, %s21
      %p175 = scmp.eq.s32.totalorder %s174, 0
      %s177 = sadd.s32 %s176, 1
      %s178 = scalar_select %p175, %s176, %s177
      %p181 = pneg %p175
      %p182 = scmp.eq.s32.totalorder %s14, 1
      %p183 = por %p181, %p182
      %p184 = scmp.ne.s32.totalorder %s176, %s179
      %p185 = scmp.eq.s32.totalorder %s14, 0
      %p186 = por %p184, %p185
      %p187 = scmp.ne.s32.totalorder %s176, %s179
      %p188 = scmp.eq.s32.totalorder %s19, 1
      %p189 = por %p187, %p188
      %p190 = scmp.ne.s32.totalorder %s179, %s180
      %p191 = scmp.eq.s32.totalorder %s19, 0
      %p192 = por %p190, %p191
      %p193 = scmp.ne.s32.totalorder %s179, %s180
      %p194 = scmp.eq.s32.totalorder %s20, 1
      %p195 = por %p193, %p194
      %p197 = scmp.ne.s32.totalorder %s180, %s196
      %p198 = scmp.eq.s32.totalorder %s20, 0
      %p199 = por %p197, %p198
      %p200 = scmp.le.s32.totalorder 1, %s14
      %p201 = scmp.lt.s32.totalorder %s14, 3
      %p202 = pnand %p200, %p201
      %p203 = pneg %p202
      // Predicated region
      $region9: #{tpu_custom_call.1} parent=5 // pred_check
        _
      $region10: #{tpu_custom_call.1} parent=5 // pred_check_branch
        %205 = sbr.rel (%p202) target = $region12
      $region11: #{tpu_custom_call.1} parent=5 // pred_region
        %s206 = ssub.s32 %s14, 1
        // Predicated region
        $region13: #{tpu_custom_call.1} parent=11 // pred_check
          %p207 = pneg %p61
        $region14: #{tpu_custom_call.1} parent=11 // pred_check_branch
          %209 = sbr.rel (%p207) target = $region16
        $region15: #{tpu_custom_call.1} parent=11 // pred_region
          %s211 = ssub.s32 256, 256
          %212 = vsyncadd [#allocation3], %s211
          %s213 = sshll.u32 [#allocation2], 4
          %s214 = int_to_ptr.vmem [resolvable:$true] %s213
          %219 = dma.hbm_to_vmem [thread:$0]  %s1, 256, %s214, [#allocation3], 128, 128, 8
        $region16: #{tpu_custom_call.1} parent=11 // pred_fallthru
          _
        // Predicated region
        $region17: #{tpu_custom_call.1} parent=11 // pred_check
          %p220 = pneg %p82
        $region18: #{tpu_custom_call.1} parent=11 // pred_check_branch
          %222 = sbr.rel (%p220) target = $region20
        $region19: #{tpu_custom_call.1} parent=11 // pred_region
          _
        $region20: #{tpu_custom_call.1} parent=11 // pred_fallthru
          _
        // Predicated region
        $region21: #{tpu_custom_call.1} parent=11 // pred_check
          %p223 = pneg %p103
        $region22: #{tpu_custom_call.1} parent=11 // pred_check_branch
          %225 = sbr.rel (%p223) target = $region24
        $region23: #{tpu_custom_call.1} parent=11 // pred_region
          _
        $region24: #{tpu_custom_call.1} parent=11 // pred_fallthru
          _
        // Predicated region
        $region25: #{tpu_custom_call.1} parent=11 // pred_check
          %p226 = pneg %p124
        $region26: #{tpu_custom_call.1} parent=11 // pred_check_branch
          %228 = sbr.rel (%p226) target = $region28
        $region27: #{tpu_custom_call.1} parent=11 // pred_region
          _
        $region28: #{tpu_custom_call.1} parent=11 // pred_fallthru
          _
        // Predicated region
        $region29: #{tpu_custom_call.1} parent=11 // pred_check
          %p229 = pneg %p145
        $region30: #{tpu_custom_call.1} parent=11 // pred_check_branch
          %231 = sbr.rel (%p229) target = $region32
        $region31: #{tpu_custom_call.1} parent=11 // pred_region
          _
        $region32: #{tpu_custom_call.1} parent=11 // pred_fallthru
          _
        // Predicated region
        $region33: #{tpu_custom_call.1} parent=11 // pred_check
          %p232 = pneg %p166
        $region34: #{tpu_custom_call.1} parent=11 // pred_check_branch
          %234 = sbr.rel (%p232) target = $region36
        $region35: #{tpu_custom_call.1} parent=11 // pred_region
          _
        $region36: #{tpu_custom_call.1} parent=11 // pred_fallthru
          _
      $region12: #{tpu_custom_call.1} parent=5 // pred_fallthru
        _
      %p235 = scmp.lt.s32.totalorder %s14, 2
      // Predicated region
      $region37: #{tpu_custom_call.1} parent=5 // pred_check
        %p236 = pneg %p235
      $region38: #{tpu_custom_call.1} parent=5 // pred_check_branch
        %238 = sbr.rel (%p236) target = $region40
      $region39: #{tpu_custom_call.1} parent=5 // pred_region
        // Predicated region
        $region41: #{tpu_custom_call.1} parent=39 // pred_check
          %p239 = pneg %p34
        $region42: #{tpu_custom_call.1} parent=39 // pred_check_branch
          %241 = sbr.rel (%p239) target = $region44
        $region43: #{tpu_custom_call.1} parent=39 // pred_region
          %p242 = scmp.lt.s32.totalorder %s14, 1
          %s243 = scalar_select %p242, %s14, 1
          %s244 = smul.addr %s243, 8
          %s245 = scalar_lea.vmem %s0, %s244
        $region44: #{tpu_custom_call.1} parent=39 // pred_fallthru
          _
      $region40: #{tpu_custom_call.1} parent=5 // pred_fallthru
        _
      %p246 = scmp.le.s32.totalorder 1, %s14
      %p247 = scmp.lt.s32.totalorder %s14, 3
      %p248 = pnand %p246, %p247
      %p249 = pneg %p248
      // Predicated region
      $region45: #{tpu_custom_call.1} parent=5 // pred_check
        _
      $region46: #{tpu_custom_call.1} parent=5 // pred_check_branch
        %251 = sbr.rel (%p248) target = $region48
      $region47: #{tpu_custom_call.1} parent=5 // pred_region
        %s252 = ssub.s32 %s14, 1
        // Predicated region
        $region49: #{tpu_custom_call.1} parent=47 // pred_check
          %p253 = pneg %p61
        $region50: #{tpu_custom_call.1} parent=47 // pred_check_branch
          %255 = sbr.rel (%p253) target = $region52
        $region51: #{tpu_custom_call.1} parent=47 // pred_region
          %256 = dma.done [#allocation3], 256
        $region52: #{tpu_custom_call.1} parent=47 // pred_fallthru
          _
        %p257 = scmp.lt.s32.totalorder %s19, 1
        %s258 = scalar_select %p257, %s19, 1
        %s259 = smul.addr %s258, 8
        %s260 = scalar_lea.vmem %s0, %s259
        %p261 = pneg %p40
        %p262 = pneg %p37
        %p263 = pneg %p61
        %p264 = pneg %p58
        %p265 = pneg %p82
        %p266 = pneg %p79
        %p267 = pneg %p103
        %p268 = pneg %p100
        %p269 = pneg %p124
        %p270 = pneg %p121
        %p271 = pneg %p145
        %p272 = pneg %p142
        %p273 = pneg %p166
        %p274 = pneg %p163
        %p275 = pneg %p192
        %p276 = pneg %p189
        %p277 = scmp.lt.s32.totalorder %s19, 1
        %s278 = scalar_select %p277, %s19, 1
        %s279 = smul.addr %s278, 8
        %s280 = scalar_lea.vmem %s7, %s279
        %p281 = scmp.lt.s32.totalorder %s19, 1
        %s282 = scalar_select %p281, %s19, 1
        %s283 = smul.addr %s282, 8
        %s284 = scalar_lea.vmem %s0, %s283
        %p285 = scmp.lt.s32.totalorder %s19, 1
        %s286 = scalar_select %p285, %s19, 1
        %s287 = smul.addr %s286, 8
        %s288 = scalar_lea.vmem %s7, %s287
        %v289 = vld [vmem:[%s284] sm:$0xff]
        %v290 = vld [vmem:[#allocation2] sm:$0xff]
        %v291 = vld [vmem:[#allocation2 + $0x8] sm:$0xff]
        %v292 = vld [vmem:[%s2] sm:$0x1]
        %v294 = vlaneseq
        %v295 = vshrl.u32 %v294, 7
        %v296 = vsub.s32 0, %v295
        %v297 = vrot.slane %v292, %v296
        %vm299 = vcmask 130048
        %v301 = vsel %vm299, %v289, 0
        %303 = vmatprep.subr.mxu0 0.0
        %304 = vmatpush1.msra.mxu0 %v290
        %305 = vmatprep.subr.mxu0 0.0
        %306 = vmatpush1.msra.mxu0 %v291
        %307 = vmatprep.subr.mxu0 0.0
        %308 = vmatpush1.msra.mxu0 0.0
        %309 = vmatprep.subr.mxu0 0.0
        %310 = vmatpush1.msra.mxu0 0.0
        %311 = vmatprep.subr.mxu0 0.0
        %312 = vmatpush1.msra.mxu0 0.0
        %313 = vmatprep.subr.mxu0 0.0
        %314 = vmatpush1.msra.mxu0 0.0
        %315 = vmatprep.subr.mxu0 0.0
        %316 = vmatpush1.msra.mxu0 0.0
        %317 = vmatprep.subr.mxu0 0.0
        %318 = vmatpush1.msra.mxu0 0.0
        %319 = vmatprep.subr.mxu0 0.0
        %320 = vmatpush1.msra.mxu0 0.0
        %321 = vmatprep.subr.mxu0 0.0
        %322 = vmatpush1.msra.mxu0 0.0
        %323 = vmatprep.subr.mxu0 0.0
        %324 = vmatpush1.msra.mxu0 0.0
        %325 = vmatprep.subr.mxu0 0.0
        %326 = vmatpush1.msra.mxu0 0.0
        %327 = vmatprep.subr.mxu0 0.0
        %328 = vmatpush1.msra.mxu0 0.0
        %329 = vmatprep.subr.mxu0 0.0
        %330 = vmatpush1.msra.mxu0 0.0
        %331 = vmatprep.subr.mxu0 0.0
        %332 = vmatpush1.msra.mxu0 0.0
        %333 = vmatprep.subr.mxu0 0.0
        %334 = vmatpush1.msra.mxu0 0.0
        %335 = vmatprep.subr.mxu0 0.0
        %336 = vmatpush1.msra.mxu0 0.0
        %337 = vmatprep.subr.mxu0 0.0
        %338 = vmatpush1.msra.mxu0 0.0
        %339 = vmatprep.subr.mxu0 0.0
        %340 = vmatpush1.msra.mxu0 0.0
        %341 = vmatprep.subr.mxu0 0.0
        %342 = vmatpush1.msra.mxu0 0.0
        %343 = vmatprep.subr.mxu0 0.0
        %344 = vmatpush1.msra.mxu0 0.0
        %345 = vmatprep.subr.mxu0 0.0
        %346 = vmatpush1.msra.mxu0 0.0
        %347 = vmatprep.subr.mxu0 0.0
        %348 = vmatpush1.msra.mxu0 0.0
        %349 = vmatprep.subr.mxu0 0.0
        %350 = vmatpush1.msra.mxu0 0.0
        %351 = vmatprep.subr.mxu0 0.0
        %352 = vmatpush1.msra.mxu0 0.0
        %353 = vmatprep.subr.mxu0 0.0
        %354 = vmatpush1.msra.mxu0 0.0
        %355 = vmatprep.subr.mxu0 0.0
        %356 = vmatpush1.msra.mxu0 0.0
        %357 = vmatprep.subr.mxu0 0.0
        %358 = vmatpush1.msra.mxu0 0.0
        %359 = vmatprep.subr.mxu0 0.0
        %360 = vmatpush1.msra.mxu0 0.0
        %361 = vmatprep.subr.mxu0 0.0
        %362 = vmatpush1.msra.mxu0 0.0
        %363 = vmatprep.subr.mxu0 0.0
        %364 = vmatpush1.msra.mxu0 0.0
        %365 = vmatprep.subr.mxu0 0.0
        %366 = vmatpush1.msra.mxu0 0.0
        %367 = vmatprep.mubr.f32.mxu0 0.0
        %368 = vmatmul.mubr.f32.gmra.mrb[0].mxu0 %v301
        %v369 = vpop.f32.mrb[0].mxu0
        %v370 = vadd.f32 %v297, %v369
        %v371 = vpop.f32.mrb[0].mxu0
        %372 = vdwg.mxu0
        %v373 = vmax.f32 %v370, 0.0
        %v374 = vld [vmem:[%s3] sm:$0xff]
        %v375 = vld [vmem:[%s3 + $0x8] sm:$0xff]
        %v376 = vld [vmem:[%s3 + $0x10] sm:$0xff]
        %v377 = vld [vmem:[%s3 + $0x18] sm:$0xff]
        %v378 = vld [vmem:[%s3 + $0x20] sm:$0xff]
        %v379 = vld [vmem:[%s3 + $0x28] sm:$0xff]
        %v380 = vld [vmem:[%s3 + $0x30] sm:$0xff]
        %v381 = vld [vmem:[%s3 + $0x38] sm:$0xff]
        %v382 = vld [vmem:[%s3 + $0x40] sm:$0xff]
        %v383 = vld [vmem:[%s3 + $0x48] sm:$0xff]
        %v384 = vld [vmem:[%s3 + $0x50] sm:$0xff]
        %v385 = vld [vmem:[%s3 + $0x58] sm:$0xff]
        %v386 = vld [vmem:[%s3 + $0x60] sm:$0xff]
        %v387 = vld [vmem:[%s3 + $0x68] sm:$0xff]
        %v388 = vld [vmem:[%s3 + $0x70] sm:$0xff]
        %v389 = vld [vmem:[%s3 + $0x78] sm:$0xff]
        %v390 = vld [vmem:[%s4] sm:$0x1]
        %v392 = vlaneseq
        %v393 = vshrl.u32 %v392, 7
        %v394 = vsub.s32 0, %v393
        %v395 = vrot.slane %v390, %v394
        %397 = vmatprep.subr.mxu0 0.0
        %398 = vmatpush1.msra.mxu0 %v374
        %399 = vmatprep.subr.mxu0 0.0
        %400 = vmatpush1.msra.mxu0 %v375
        %401 = vmatprep.subr.mxu0 0.0
        %402 = vmatpush1.msra.mxu0 %v376
        %403 = vmatprep.subr.mxu0 0.0
        %404 = vmatpush1.msra.mxu0 %v377
        %405 = vmatprep.subr.mxu0 0.0
        %406 = vmatpush1.msra.mxu0 %v378
        %407 = vmatprep.subr.mxu0 0.0
        %408 = vmatpush1.msra.mxu0 %v379
        %409 = vmatprep.subr.mxu0 0.0
        %410 = vmatpush1.msra.mxu0 %v380
        %411 = vmatprep.subr.mxu0 0.0
        %412 = vmatpush1.msra.mxu0 %v381
        %413 = vmatprep.subr.mxu0 0.0
        %414 = vmatpush1.msra.mxu0 %v382
        %415 = vmatprep.subr.mxu0 0.0
        %416 = vmatpush1.msra.mxu0 %v383
        %417 = vmatprep.subr.mxu0 0.0
        %418 = vmatpush1.msra.mxu0 %v384
        %419 = vmatprep.subr.mxu0 0.0
        %420 = vmatpush1.msra.mxu0 %v385
        %421 = vmatprep.subr.mxu0 0.0
        %422 = vmatpush1.msra.mxu0 %v386
        %423 = vmatprep.subr.mxu0 0.0
        %424 = vmatpush1.msra.mxu0 %v387
        %425 = vmatprep.subr.mxu0 0.0
        %426 = vmatpush1.msra.mxu0 %v388
        %427 = vmatprep.subr.mxu0 0.0
        %428 = vmatpush1.msra.mxu0 %v389
        %429 = vmatprep.subr.mxu0 0.0
        %430 = vmatpush1.msra.mxu0 0.0
        %431 = vmatprep.subr.mxu0 0.0
        %432 = vmatpush1.msra.mxu0 0.0
        %433 = vmatprep.subr.mxu0 0.0
        %434 = vmatpush1.msra.mxu0 0.0
        %435 = vmatprep.subr.mxu0 0.0
        %436 = vmatpush1.msra.mxu0 0.0
        %437 = vmatprep.subr.mxu0 0.0
        %438 = vmatpush1.msra.mxu0 0.0
        %439 = vmatprep.subr.mxu0 0.0
        %440 = vmatpush1.msra.mxu0 0.0
        %441 = vmatprep.subr.mxu0 0.0
        %442 = vmatpush1.msra.mxu0 0.0
        %443 = vmatprep.subr.mxu0 0.0
        %444 = vmatpush1.msra.mxu0 0.0
        %445 = vmatprep.subr.mxu0 0.0
        %446 = vmatpush1.msra.mxu0 0.0
        %447 = vmatprep.subr.mxu0 0.0
        %448 = vmatpush1.msra.mxu0 0.0
        %449 = vmatprep.subr.mxu0 0.0
        %450 = vmatpush1.msra.mxu0 0.0
        %451 = vmatprep.subr.mxu0 0.0
        %452 = vmatpush1.msra.mxu0 0.0
        %453 = vmatprep.subr.mxu0 0.0
        %454 = vmatpush1.msra.mxu0 0.0
        %455 = vmatprep.subr.mxu0 0.0
        %456 = vmatpush1.msra.mxu0 0.0
        %457 = vmatprep.subr.mxu0 0.0
        %458 = vmatpush1.msra.mxu0 0.0
        %459 = vmatprep.subr.mxu0 0.0
        %460 = vmatpush1.msra.mxu0 0.0
        %461 = vmatprep.mubr.f32.mxu0 0.0
        %462 = vmatmul.mubr.f32.gmra.mrb[0].mxu0 %v373
        %v463 = vpop.f32.mrb[0].mxu0
        %v464 = vadd.f32 %v395, %v463
        %v465 = vpop.f32.mrb[0].mxu0
        %466 = vdwg.mxu0
        %v467 = vmax.f32 %v464, 0.0
        %v468 = vld [vmem:[%s5] sm:$0xff]
        %v469 = vld [vmem:[%s5 + $0x8] sm:$0xff]
        %v470 = vld [vmem:[%s5 + $0x10] sm:$0xff]
        %v471 = vld [vmem:[%s5 + $0x18] sm:$0xff]
        %v472 = vld [vmem:[%s5 + $0x20] sm:$0xff]
        %v473 = vld [vmem:[%s5 + $0x28] sm:$0xff]
        %v474 = vld [vmem:[%s5 + $0x30] sm:$0xff]
        %v475 = vld [vmem:[%s5 + $0x38] sm:$0xff]
        %v476 = vld [vmem:[%s5 + $0x40] sm:$0xff]
        %v477 = vld [vmem:[%s5 + $0x48] sm:$0xff]
        %v478 = vld [vmem:[%s5 + $0x50] sm:$0xff]
        %v479 = vld [vmem:[%s5 + $0x58] sm:$0xff]
        %v480 = vld [vmem:[%s5 + $0x60] sm:$0xff]
        %v481 = vld [vmem:[%s5 + $0x68] sm:$0xff]
        %v482 = vld [vmem:[%s5 + $0x70] sm:$0xff]
        %v483 = vld [vmem:[%s5 + $0x78] sm:$0xff]
        %v484 = vld [vmem:[%s6] sm:$0x1]
        %v486 = vlaneseq
        %v487 = vshrl.u32 %v486, 7
        %v488 = vsub.s32 0, %v487
        %v489 = vrot.slane %v484, %v488
        %491 = vmatprep.subr.mxu0 0.0
        %492 = vmatpush1.msra.mxu0 %v468
        %493 = vmatprep.subr.mxu0 0.0
        %494 = vmatpush1.msra.mxu0 %v469
        %495 = vmatprep.subr.mxu0 0.0
        %496 = vmatpush1.msra.mxu0 %v470
        %497 = vmatprep.subr.mxu0 0.0
        %498 = vmatpush1.msra.mxu0 %v471
        %499 = vmatprep.subr.mxu0 0.0
        %500 = vmatpush1.msra.mxu0 %v472
        %501 = vmatprep.subr.mxu0 0.0
        %502 = vmatpush1.msra.mxu0 %v473
        %503 = vmatprep.subr.mxu0 0.0
        %504 = vmatpush1.msra.mxu0 %v474
        %505 = vmatprep.subr.mxu0 0.0
        %506 = vmatpush1.msra.mxu0 %v475
        %507 = vmatprep.subr.mxu0 0.0
        %508 = vmatpush1.msra.mxu0 %v476
        %509 = vmatprep.subr.mxu0 0.0
        %510 = vmatpush1.msra.mxu0 %v477
        %511 = vmatprep.subr.mxu0 0.0
        %512 = vmatpush1.msra.mxu0 %v478
        %513 = vmatprep.subr.mxu0 0.0
        %514 = vmatpush1.msra.mxu0 %v479
        %515 = vmatprep.subr.mxu0 0.0
        %516 = vmatpush1.msra.mxu0 %v480
        %517 = vmatprep.subr.mxu0 0.0
        %518 = vmatpush1.msra.mxu0 %v481
        %519 = vmatprep.subr.mxu0 0.0
        %520 = vmatpush1.msra.mxu0 %v482
        %521 = vmatprep.subr.mxu0 0.0
        %522 = vmatpush1.msra.mxu0 %v483
        %523 = vmatprep.subr.mxu0 0.0
        %524 = vmatpush1.msra.mxu0 0.0
        %525 = vmatprep.subr.mxu0 0.0
        %526 = vmatpush1.msra.mxu0 0.0
        %527 = vmatprep.subr.mxu0 0.0
        %528 = vmatpush1.msra.mxu0 0.0
        %529 = vmatprep.subr.mxu0 0.0
        %530 = vmatpush1.msra.mxu0 0.0
        %531 = vmatprep.subr.mxu0 0.0
        %532 = vmatpush1.msra.mxu0 0.0
        %533 = vmatprep.subr.mxu0 0.0
        %534 = vmatpush1.msra.mxu0 0.0
        %535 = vmatprep.subr.mxu0 0.0
        %536 = vmatpush1.msra.mxu0 0.0
        %537 = vmatprep.subr.mxu0 0.0
        %538 = vmatpush1.msra.mxu0 0.0
        %539 = vmatprep.subr.mxu0 0.0
        %540 = vmatpush1.msra.mxu0 0.0
        %541 = vmatprep.subr.mxu0 0.0
        %542 = vmatpush1.msra.mxu0 0.0
        %543 = vmatprep.subr.mxu0 0.0
        %544 = vmatpush1.msra.mxu0 0.0
        %545 = vmatprep.subr.mxu0 0.0
        %546 = vmatpush1.msra.mxu0 0.0
        %547 = vmatprep.subr.mxu0 0.0
        %548 = vmatpush1.msra.mxu0 0.0
        %549 = vmatprep.subr.mxu0 0.0
        %550 = vmatpush1.msra.mxu0 0.0
        %551 = vmatprep.subr.mxu0 0.0
        %552 = vmatpush1.msra.mxu0 0.0
        %553 = vmatprep.subr.mxu0 0.0
        %554 = vmatpush1.msra.mxu0 0.0
        %555 = vmatprep.mubr.f32.mxu0 0.0
        %556 = vmatmul.mubr.f32.gmra.mrb[0].mxu0 %v467
        %v557 = vpop.f32.mrb[0].mxu0
        %v558 = vadd.f32 %v489, %v557
        %v559 = vpop.f32.mrb[0].mxu0
        %560 = vdwg.mxu0
        %vm561 = vcmask 64512
        %562 = vst.msk [vmem:[%s288] sm:$0xff] %vm561, %v558
        %p563 = scmp.lt.s32.totalorder %s19, 1
        %s564 = scalar_select %p563, %s19, 1
        %s565 = smul.addr %s564, 8
        %s566 = scalar_lea.vmem %s7, %s565
        // Predicated region
        $region53: #{tpu_custom_call.1} parent=47 // pred_check
          %p567 = pneg %p189
        $region54: #{tpu_custom_call.1} parent=47 // pred_check_branch
          %569 = sbr.rel (%p567) target = $region56
        $region55: #{tpu_custom_call.1} parent=47 // pred_region
          _
        $region56: #{tpu_custom_call.1} parent=47 // pred_fallthru
          _
      $region48: #{tpu_custom_call.1} parent=5 // pred_fallthru
        _
      %p570 = scmp.le.s32.totalorder 2, %s14
      // Predicated region
      $region57: #{tpu_custom_call.1} parent=5 // pred_check
        %p571 = pneg %p570
      $region58: #{tpu_custom_call.1} parent=5 // pred_check_branch
        %573 = sbr.rel (%p571) target = $region60
      $region59: #{tpu_custom_call.1} parent=5 // pred_region
        %s574 = ssub.s32 %s14, 2
        // Predicated region
        $region61: #{tpu_custom_call.1} parent=59 // pred_check
          %p575 = pneg %p195
        $region62: #{tpu_custom_call.1} parent=59 // pred_check_branch
          %577 = sbr.rel (%p575) target = $region64
        $region63: #{tpu_custom_call.1} parent=59 // pred_region
          %p578 = scmp.lt.s32.totalorder %s20, 1
          %s579 = scalar_select %p578, %s20, 1
          %s580 = smul.addr %s579, 8
          %s581 = scalar_lea.vmem %s7, %s580
        $region64: #{tpu_custom_call.1} parent=59 // pred_fallthru
          _
      $region60: #{tpu_custom_call.1} parent=5 // pred_fallthru
        _
    $region6: #{tpu_custom_call.1} parent=1 // loop_footer
      %s18 = sadd.s32 1, %s14
    $region7: #{tpu_custom_call.1} parent=1 // loop_footer_branch
      %13 = sbr.rel target = $region3
    $region8: #{tpu_custom_call.1} parent=1 // loop_exit
      _
    %582 = vsyncpa [#allocation3], 1
    %s583 = scalar_lea.sflag [#allocation3], 1
    %584 = vsyncpa %s583, 1

</llo_original>
